<compile_context>
chip_gen: v7x
topology: tpu7x:2x2x1
jax: 0.10.0
libtpu: 0.0.40
codegen_flags: <defaults>
</compile_context>

<pallas_src>
import jax
import jax.numpy as jnp
from jax.experimental import pallas as pl
from jax.experimental.pallas import tpu as pltpu


def _round_up(x, m):
    return ((x + m - 1) // m) * m


def _calibrator_kernel(x_ref, w_ref, o_ref):
    # x_ref: (TM, H) in VMEM, w_ref: (H, 1) resident in VMEM, o_ref: (TM, 1).
    # Linear(hidden, 1, bias=False): logits = x @ w, f32 accumulation on the MXU.
    logits = jnp.dot(x_ref[...], w_ref[...], preferred_element_type=jnp.float32)
    o_ref[...] = jax.nn.sigmoid(logits).astype(o_ref.dtype)


def _choose_tile_rows(M, H, itemsize, per_buffer_bytes, min_grid_steps=4):
    """Largest 8-aligned row count whose (lane-padded) tile fits per_buffer_bytes,
    additionally capped so the grid has >= min_grid_steps steps when M allows."""
    row_bytes = max(1, _round_up(H, 128) * itemsize)
    rows_fit = max(8, ((per_buffer_bytes // row_bytes) // 8) * 8)
    tm = min(rows_fit, _round_up(M, 8))
    if M >= min_grid_steps * 8:
        # Keep several grid steps so megacore sharding and double-buffered
        # DMA/compute overlap are actually exercised (v7x especially).
        tm = min(tm, _round_up(pl.cdiv(M, min_grid_steps), 8))
    return max(8, tm)


def calibrator_forward(hidden_states, weight, *,
                       per_buffer_bytes=6 * 1024 * 1024):
    """hidden_states: (..., H); weight: (1, H) in PyTorch Linear (out, in) layout.
    Returns (sigmoid(hidden_states @ weight.T), None), matching the PyTorch module."""
    orig_shape = hidden_states.shape
    H = orig_shape[-1]
    x2d = hidden_states.reshape(-1, H)
    M = x2d.shape[0]

    x_itemsize = jnp.dtype(hidden_states.dtype).itemsize
    out_dtype = hidden_states.dtype
    out_itemsize = jnp.dtype(out_dtype).itemsize

    # Weight: transpose + dtype-cast once in the wrapper (stays VMEM-resident
    # across grid steps via a constant index_map).
    w_col = weight.reshape(H, 1).astype(hidden_states.dtype)
    w_itemsize = jnp.dtype(w_col.dtype).itemsize

    TM = _choose_tile_rows(M, H, x_itemsize, per_buffer_bytes)
    grid = (pl.cdiv(M, TM),)

    # Explicit scoped-VMEM limit consistent with the tile sizing:
    # double-buffered x tile + lane-padded (H,1) weight + lane-padded (TM,1)
    # output, plus slack for compiler-internal scratch.
    x_tile_bytes = TM * _round_up(H, 128) * x_itemsize
    w_tile_bytes = _round_up(H, 8) * 128 * w_itemsize
    o_tile_bytes = TM * 128 * out_itemsize
    vmem_limit = 2 * (x_tile_bytes + w_tile_bytes + o_tile_bytes) + (2 << 20)
    vmem_limit = max(16 * 1024 * 1024, min(vmem_limit, 48 * 1024 * 1024))

    cost = pl.CostEstimate(
        flops=2 * M * H,
        transcendentals=M,  # one sigmoid (exp) per row
        bytes_accessed=M * H * x_itemsize + H * w_itemsize + M * out_itemsize,
    )

    out = pl.pallas_call(
        _calibrator_kernel,
        out_shape=jax.ShapeDtypeStruct((M, 1), out_dtype),
        grid_spec=pltpu.PrefetchScalarGridSpec(
            num_scalar_prefetch=0,
            grid=grid,
            in_specs=[
                pl.BlockSpec((TM, H), lambda i: (i, 0)),   # streamed row tiles
                pl.BlockSpec((H, 1), lambda i: (0, 0)),    # resident weight (MXU-RHS layout)
            ],
            out_specs=pl.BlockSpec((TM, 1), lambda i: (i, 0)),
        ),
        compiler_params=pltpu.CompilerParams(
            dimension_semantics=("parallel",),
            vmem_limit_bytes=int(vmem_limit),
        ),
        cost_estimate=cost,
    )(x2d, w_col)

    return out.reshape(orig_shape[:-1] + (1,)), None


if __name__ == "__main__":
    key = jax.random.PRNGKey(0)
    k_x, k_w = jax.random.split(key)

    batch, seq, hidden = 2, 8, 32

    # Deterministic "parameter init": emulate nn.Linear default U(-1/sqrt(H), 1/sqrt(H)).
    bound = 1.0 / (hidden ** 0.5)
    weight = jax.random.uniform(k_w, (1, hidden), jnp.float32, -bound, bound)

    hidden_states = jax.random.normal(k_x, (batch, seq, hidden), jnp.float32)

    probs, extra = calibrator_forward(hidden_states, weight)
    probs = jax.block_until_ready(probs)

    # Cross-check against plain-JAX reference.
    ref = jax.nn.sigmoid(hidden_states @ weight.T)
    assert probs.shape == (batch, seq, 1)
    assert extra is None
    assert jnp.allclose(probs, ref, atol=2e-5, rtol=2e-5)

    print("KERNEL_OK")
</pallas_src>

<mosaic_0001>
module attributes {stable_mosaic.version = 11 : i64} {
  func.func @_calibrator_kernel(%arg0: i32, %arg1: memref<16x32xf32, #tpu.memory_space<vmem>>, %arg2: memref<32x1xf32, #tpu.memory_space<vmem>>, %arg3: memref<16x1xf32, #tpu.memory_space<vmem>>) attributes {dimension_semantics = [#tpu.dimension_semantics<parallel>], iteration_bounds = array<i64: 1>, scalar_prefetch = 0 : i64, scratch_operands = 0 : i64, tpu.core_type = #tpu.core_type<tc>, window_params = [{transform_indices = @transform_0, window_bounds = array<i64: 16, 32>}, {pipeline_mode = #tpu.pipeline_mode<synchronous>, transform_indices = @transform_1, window_bounds = array<i64: 32, 1>}, {transform_indices = @transform_2, window_bounds = array<i64: 16, 1>}]} {
    %c0 = arith.constant 0 : index
    %c0_0 = arith.constant 0 : index
    %0 = vector.load %arg1[%c0, %c0_0] : memref<16x32xf32, #tpu.memory_space<vmem>>, vector<16x32xf32>
    %c0_1 = arith.constant 0 : index
    %c0_2 = arith.constant 0 : index
    %1 = vector.load %arg2[%c0_1, %c0_2] : memref<32x1xf32, #tpu.memory_space<vmem>>, vector<32x1xf32>
    %cst = arith.constant dense<0.000000e+00> : vector<16x1xf32>
    %2 = tpu.matmul %0, %1, %cst {dimension_numbers = #tpu.dot_dimension_numbers<[1], [0], [0], [1], [0, 0, 1, 1], [], []>} : vector<16x32xf32>, vector<32x1xf32>, vector<16x1xf32> -> vector<16x1xf32>
    %3 = arith.negf %2 : vector<16x1xf32>
    %4 = math.exp %3 : vector<16x1xf32>
    %cst_3 = arith.constant 1.000000e+00 : f32
    %5 = vector.broadcast %cst_3 : f32 to vector<16x1xf32>
    %6 = arith.addf %5, %4 : vector<16x1xf32>
    %7 = arith.divf %5, %6 : vector<16x1xf32>
    %c0_4 = arith.constant 0 : index
    %c0_5 = arith.constant 0 : index
    %8 = vector.load %arg3[%c0_4, %c0_5] : memref<16x1xf32, #tpu.memory_space<vmem>>, vector<16x1xf32>
    tpu.vector_store %arg3[%c0_4, %c0_5], %7 {strides = array<i32>} : memref<16x1xf32, #tpu.memory_space<vmem>>, vector<16x1xf32>,
    return
  }
  func.func @transform_0(%arg0: i32) -> (i32, i32) {
    %c0_i32 = arith.constant 0 : i32
    %c0_i32_0 = arith.constant 0 : i32
    return %arg0, %c0_i32 : i32, i32
  }
  func.func @transform_1(%arg0: i32) -> (i32, i32) {
    %c0_i32 = arith.constant 0 : i32
    %c0_i32_0 = arith.constant 0 : i32
    %c0_i32_1 = arith.constant 0 : i32
    return %c0_i32, %c0_i32_0 : i32, i32
  }
  func.func @transform_2(%arg0: i32) -> (i32, i32) {
    %c0_i32 = arith.constant 0 : i32
    %c0_i32_0 = arith.constant 0 : i32
    return %arg0, %c0_i32 : i32, i32
  }
}

</mosaic_0001>

<llo_original>
// kernel: tpu_custom_call.1
$region0: #{tpu_custom_call.1}
  #allocation0 [shape = 'u32[]', space=smem, size = 0x4, offset = 0x4, fixed_abs, tag = 'smem constant byte address 0x4 - core index']
  #allocation1 [shape = 'u32[144,128]{1,0:T(1,128)}', space=vmem, size = 0x12000, scoped, tag = 'internal scratch']
  %s0 = inlined_call_operand.vmem [shape: f32[16,32], index: 0, kind: input, shape index: {}]
  %s1 = inlined_call_operand.vmem [shape: f32[32,1], index: 1, kind: input, shape index: {}]
  %s2 = inlined_call_operand.vmem [shape: f32[16,1], index: 2, kind: output, shape index: {}]
  %s3 = sld [smem:[#allocation0]]
  $region18: #{tpu_custom_call.1} parent=0
    _
  %s5 = ssub.s32 1, %s3
  %s6 = scalar_select 0, %s5, %s3
  // Predicated region
  $region2: #{tpu_custom_call.1} parent=0 // pred_check
    _
  $region3: #{tpu_custom_call.1} parent=0 // pred_check_branch
    %8 = sbr.rel (0) target = $region5
  $region4: #{tpu_custom_call.1} parent=0 // pred_region
    _
  $region5: #{tpu_custom_call.1} parent=0 // pred_fallthru
    _
  // Predicated region
  $region6: #{tpu_custom_call.1} parent=0 // pred_check
    _
  $region7: #{tpu_custom_call.1} parent=0 // pred_check_branch
    %10 = sbr.rel (0) target = $region9
  $region8: #{tpu_custom_call.1} parent=0 // pred_region
    _
  $region9: #{tpu_custom_call.1} parent=0 // pred_fallthru
    _
  %v11 = vld [vmem:[%s0] sm:$0xff]
  %v12 = vld [vmem:[%s0 + $0x8] sm:$0xff]
  %v13 = vld [vmem:[%s1] sm:$0xff]
  %v14 = vld [vmem:[%s1 + $0x8] sm:$0xff]
  %v15 = vld [vmem:[%s1 + $0x10] sm:$0xff]
  %v16 = vld [vmem:[%s1 + $0x18] sm:$0xff]
  %vm17 = vcmask 261120
  %v19 = vsel %vm17, %v11, 0
  %v22 = vsel %vm17, %v12, 0
  %24 = vmatprep.subr.mxu0 0.0
  %25 = vmatpush1.msra.mxu0 %v13
  %26 = vmatprep.subr.mxu0 0.0
  %27 = vmatpush1.msra.mxu0 %v14
  %28 = vmatprep.subr.mxu0 0.0
  %29 = vmatpush1.msra.mxu0 %v15
  %30 = vmatprep.subr.mxu0 0.0
  %31 = vmatpush1.msra.mxu0 %v16
  %32 = vmatprep.subr.mxu0 0.0
  %33 = vmatpush1.msra.mxu0 0.0
  %34 = vmatprep.subr.mxu0 0.0
  %35 = vmatpush1.msra.mxu0 0.0
  %36 = vmatprep.subr.mxu0 0.0
  %37 = vmatpush1.msra.mxu0 0.0
  %38 = vmatprep.subr.mxu0 0.0
  %39 = vmatpush1.msra.mxu0 0.0
  %40 = vmatprep.subr.mxu0 0.0
  %41 = vmatpush1.msra.mxu0 0.0
  %42 = vmatprep.subr.mxu0 0.0
  %43 = vmatpush1.msra.mxu0 0.0
  %44 = vmatprep.subr.mxu0 0.0
  %45 = vmatpush1.msra.mxu0 0.0
  %46 = vmatprep.subr.mxu0 0.0
  %47 = vmatpush1.msra.mxu0 0.0
  %48 = vmatprep.subr.mxu0 0.0
  %49 = vmatpush1.msra.mxu0 0.0
  %50 = vmatprep.subr.mxu0 0.0
  %51 = vmatpush1.msra.mxu0 0.0
  %52 = vmatprep.subr.mxu0 0.0
  %53 = vmatpush1.msra.mxu0 0.0
  %54 = vmatprep.subr.mxu0 0.0
  %55 = vmatpush1.msra.mxu0 0.0
  %56 = vmatprep.subr.mxu0 0.0
  %57 = vmatpush1.msra.mxu0 0.0
  %58 = vmatprep.subr.mxu0 0.0
  %59 = vmatpush1.msra.mxu0 0.0
  %60 = vmatprep.subr.mxu0 0.0
  %61 = vmatpush1.msra.mxu0 0.0
  %62 = vmatprep.subr.mxu0 0.0
  %63 = vmatpush1.msra.mxu0 0.0
  %64 = vmatprep.subr.mxu0 0.0
  %65 = vmatpush1.msra.mxu0 0.0
  %66 = vmatprep.subr.mxu0 0.0
  %67 = vmatpush1.msra.mxu0 0.0
  %68 = vmatprep.subr.mxu0 0.0
  %69 = vmatpush1.msra.mxu0 0.0
  %70 = vmatprep.subr.mxu0 0.0
  %71 = vmatpush1.msra.mxu0 0.0
  %72 = vmatprep.subr.mxu0 0.0
  %73 = vmatpush1.msra.mxu0 0.0
  %74 = vmatprep.subr.mxu0 0.0
  %75 = vmatpush1.msra.mxu0 0.0
  %76 = vmatprep.subr.mxu0 0.0
  %77 = vmatpush1.msra.mxu0 0.0
  %78 = vmatprep.subr.mxu0 0.0
  %79 = vmatpush1.msra.mxu0 0.0
  %80 = vmatprep.subr.mxu0 0.0
  %81 = vmatpush1.msra.mxu0 0.0
  %82 = vmatprep.subr.mxu0 0.0
  %83 = vmatpush1.msra.mxu0 0.0
  %84 = vmatprep.subr.mxu0 0.0
  %85 = vmatpush1.msra.mxu0 0.0
  %86 = vmatprep.subr.mxu0 0.0
  %87 = vmatpush1.msra.mxu0 0.0
  %88 = vmatprep.mubr.f32.mxu0 0.0
  %89 = vmatmul.mubr.f32.gmra.mrb[0].mxu0 %v19
  %v90 = vpop.f32.mrb[0].mxu0
  %v91 = vadd.f32 0.0, %v90
  %v92 = vpop.f32.mrb[0].mxu0
  %93 = vmatprep.mubr.f32.mxu0 0.0
  %94 = vmatmul.mubr.f32.gmra.mrb[0].mxu0 %v22
  %v95 = vpop.f32.mrb[0].mxu0
  %v96 = vadd.f32 0.0, %v95
  %v97 = vpop.f32.mrb[0].mxu0
  %98 = vdwg.mxu0
  %v99 = vxor.u32 %v91, 2147483648
  %v100 = vxor.u32 %v96, 2147483648
  %v101 = vmul.f32 %v99, 1.442695
  %v102 = vpow.pop %v101
  %v103 = vmul.f32 %v100, 1.442695
  %v104 = vpow.pop %v103
  %v105 = vadd.f32 %v102, 1.0
  %v106 = vadd.f32 %v104, 1.0
  %v107 = vrcp.pop %v105
  %v108 = vmul.f32 1.0, %v107
  %v109 = vrcp.pop %v106
  %v110 = vmul.f32 1.0, %v109
  %vm111 = vcmask 7168
  %112 = vst.msk [vmem:[%s2] sm:$0xff] %vm111, %v108
  %113 = vst.msk [vmem:[%s2 + $0x8] sm:$0xff] %vm111, %v110
  // Predicated region
  $region10: #{tpu_custom_call.1} parent=0 // pred_check
    _
  $region11: #{tpu_custom_call.1} parent=0 // pred_check_branch
    %115 = sbr.rel (0) target = $region13
  $region12: #{tpu_custom_call.1} parent=0 // pred_region
    _
  $region13: #{tpu_custom_call.1} parent=0 // pred_fallthru
    _
  // Predicated region
  $region14: #{tpu_custom_call.1} parent=0 // pred_check
    _
  $region15: #{tpu_custom_call.1} parent=0 // pred_check_branch
    %117 = sbr.rel (0) target = $region17
  $region16: #{tpu_custom_call.1} parent=0 // pred_region
    _
  $region17: #{tpu_custom_call.1} parent=0 // pred_fallthru
    _

</llo_original>
